<compile_context>
chip_gen: v5e
topology: v5e:2x2
jax: 0.10.0
libtpu: 0.0.40
codegen_flags: <defaults>
</compile_context>

<pallas_src>
import functools

import jax
import jax.numpy as jnp
from jax.experimental import pallas as pl
from jax.experimental.pallas import tpu as pltpu


def _round_up(x: int, m: int) -> int:
    return ((x + m - 1) // m) * m


def _cbm_loss_kernel(true_b,          # static python int: real batch size
                     coef_ref,        # SMEM f32[2]: [l_c_coef, l_y_coef]
                     cpred_ref,       # VMEM [TB, n_concepts] probabilities
                     clab_ref,        # VMEM [TB, n_concepts] targets
                     zlogit_ref,      # VMEM [TB, n_classes] logits
                     yid_ref,         # VMEM [TB, 1] int32 class ids
                     out_ref,         # SMEM f32[3]: [l_c, l_y, l_total]
                     acc_ref):        # SMEM f32[2] scratch accumulators
    i = pl.program_id(0)
    tb = cpred_ref.shape[0]

    @pl.when(i == 0)
    def _():
        acc_ref[0] = 0.0
        acc_ref[1] = 0.0

    # Validity mask for padded tail rows (true batch size is `true_b`).
    row_idx = i * tb + jax.lax.broadcasted_iota(jnp.int32, (tb, 1), 0)
    valid = (row_idx < true_b).astype(jnp.float32)            # [TB, 1]

    # ---------------- BCE over concept predictions (partial sum) -----------
    p = cpred_ref[...].astype(jnp.float32)                    # [TB, n_concepts]
    t = clab_ref[...].astype(jnp.float32)
    # PyTorch BCELoss clamps log terms at -100 for numerical safety.
    log_p = jnp.maximum(jnp.log(p), -100.0)
    log_1mp = jnp.maximum(jnp.log(1.0 - p), -100.0)
    bce_rows = jnp.sum(-(t * log_p + (1.0 - t) * log_1mp),
                       axis=-1, keepdims=True)                # lane-first [TB,1]
    acc_ref[0] += jnp.sum(bce_rows * valid)

    # ------------- CrossEntropy over class logits (partial sum) ------------
    z = zlogit_ref[...].astype(jnp.float32)                   # [TB, n_classes]
    y = yid_ref[...]                                          # [TB, 1] int32
    m = jnp.max(z, axis=-1, keepdims=True)
    lse = m + jnp.log(jnp.sum(jnp.exp(z - m), axis=-1, keepdims=True))
    lane_idx = jax.lax.broadcasted_iota(jnp.int32, z.shape, 1)
    z_y = jnp.sum(jnp.where(lane_idx == y, z, 0.0),
                  axis=-1, keepdims=True)                     # [TB, 1]
    acc_ref[1] += jnp.sum((lse - z_y) * valid)

    # ---------------------------- finalize ----------------------------------
    @pl.when(i == pl.num_programs(0) - 1)
    def _():
        n_concepts = cpred_ref.shape[1]
        l_c = coef_ref[0] * acc_ref[0] / jnp.float32(true_b * n_concepts)
        l_y = coef_ref[1] * acc_ref[1] / jnp.float32(true_b)
        out_ref[0] = l_c
        out_ref[1] = l_y
        out_ref[2] = l_c + l_y


def cbm_loss(outputs, batch, loss_coefs):
    """JAX/Pallas equivalent of CBMLoss.forward.

    outputs: {'concept_preds': f32/bf16[B, n_concepts] in (0,1),
              'class_preds':   f32/bf16[B, n_classes] logits}
    batch:   {'attr_scores':   f32/bf16[B, n_concepts] targets in [0,1],
              'class_ids':     i32[B] class indices}
    returns: (loss_dict, l_total)
    """
    concept_preds = outputs['concept_preds']
    class_preds = outputs['class_preds']
    concept_labels = batch['attr_scores']
    class_ids = batch['class_ids'].astype(jnp.int32).reshape(-1, 1)

    B, n_concepts = concept_preds.shape
    n_classes = class_preds.shape[1]

    # Batch tile: multiple of 8 sublanes, capped at 512 rows so that the
    # double-buffered per-step footprint fits comfortably on v5e/v6e/v7x.
    TB = min(512, _round_up(B, 8))
    B_pad = _round_up(B, TB)
    pad = B_pad - B
    if pad:
        # Safe padding values; padded rows are masked out inside the kernel.
        concept_preds = jnp.pad(concept_preds, ((0, pad), (0, 0)),
                                constant_values=0.5)
        concept_labels = jnp.pad(concept_labels, ((0, pad), (0, 0)))
        class_preds = jnp.pad(class_preds, ((0, pad), (0, 0)))
        class_ids = jnp.pad(class_ids, ((0, pad), (0, 0)))

    # Runtime loss coefficients (SMEM scalars): no recompile when they change.
    coefs = jnp.asarray([loss_coefs['l_c'], loss_coefs['l_y']],
                        dtype=jnp.float32)

    num_blocks = B_pad // TB
    kernel = functools.partial(_cbm_loss_kernel, B)

    out = pl.pallas_call(
        kernel,
        out_shape=jax.ShapeDtypeStruct((3,), jnp.float32),
        grid_spec=pltpu.PrefetchScalarGridSpec(
            num_scalar_prefetch=0,
            grid=(num_blocks,),
            in_specs=[
                pl.BlockSpec(memory_space=pltpu.SMEM),               # coefs
                pl.BlockSpec((TB, n_concepts), lambda i: (i, 0)),    # preds
                pl.BlockSpec((TB, n_concepts), lambda i: (i, 0)),    # labels
                pl.BlockSpec((TB, n_classes), lambda i: (i, 0)),     # logits
                pl.BlockSpec((TB, 1), lambda i: (i, 0)),             # class ids
            ],
            out_specs=pl.BlockSpec(memory_space=pltpu.SMEM),
            scratch_shapes=[pltpu.SMEM((2,), jnp.float32)],
        ),
        compiler_params=pltpu.CompilerParams(
            dimension_semantics=("arbitrary",),   # reduction axis (accumulator)
            vmem_limit_bytes=32 * 1024 * 1024,    # safe on v5e/v6e/v7x
        ),
    )(coefs, concept_preds, concept_labels, class_preds, class_ids)

    l_c = out[0]
    l_y = out[1]
    l_total = out[2]
    loss_dict = {'l_c': l_c, 'l_y': l_y}
    return loss_dict, l_total


if __name__ == "__main__":
    key = jax.random.PRNGKey(0)
    k1, k2, k3, k4 = jax.random.split(key, 4)

    # Small, deterministic shapes; B=10 deliberately exercises the padded /
    # masked tail-row path (TB rounds up to 16).
    B, n_concepts, n_classes = 10, 16, 8

    concept_preds = jax.nn.sigmoid(
        jax.random.normal(k1, (B, n_concepts), dtype=jnp.float32))
    concept_labels = jax.random.bernoulli(
        k2, 0.5, (B, n_concepts)).astype(jnp.float32)
    class_preds = jax.random.normal(k3, (B, n_classes), dtype=jnp.float32)
    class_ids = jax.random.randint(k4, (B,), 0, n_classes, dtype=jnp.int32)

    outputs = {'concept_preds': concept_preds, 'class_preds': class_preds}
    batch = {'attr_scores': concept_labels, 'class_ids': class_ids}
    loss_coefs = {'l_c': 0.5, 'l_y': 1.0}

    loss_dict, l_total = cbm_loss(outputs, batch, loss_coefs)
    jax.block_until_ready(l_total)

    # Pure-JAX reference check (not part of the kernel hot path).
    ref_lc = loss_coefs['l_c'] * jnp.mean(
        -(concept_labels * jnp.log(concept_preds)
          + (1.0 - concept_labels) * jnp.log(1.0 - concept_preds)))
    logz = jax.nn.logsumexp(class_preds, axis=-1)
    ref_ly = loss_coefs['l_y'] * jnp.mean(
        logz - class_preds[jnp.arange(B), class_ids])
    assert jnp.allclose(loss_dict['l_c'], ref_lc, rtol=1e-5, atol=1e-5)
    assert jnp.allclose(loss_dict['l_y'], ref_ly, rtol=1e-5, atol=1e-5)
    assert jnp.allclose(l_total, ref_lc + ref_ly, rtol=1e-5, atol=1e-5)

    print("KERNEL_OK")
</pallas_src>

<mosaic_0001>
module attributes {stable_mosaic.version = 11 : i64} {
  func.func @_cbm_loss_kernel(%arg0: i32, %arg1: memref<2xf32, #tpu.memory_space<smem>>, %arg2: memref<16x16xf32, #tpu.memory_space<vmem>>, %arg3: memref<16x16xf32, #tpu.memory_space<vmem>>, %arg4: memref<16x8xf32, #tpu.memory_space<vmem>>, %arg5: memref<16x1xi32, #tpu.memory_space<vmem>>, %arg6: memref<3xf32, #tpu.memory_space<smem>>, %arg7: memref<2xf32, #tpu.memory_space<smem>>) attributes {dimension_semantics = [#tpu.dimension_semantics<arbitrary>], iteration_bounds = array<i64: 1>, scalar_prefetch = 0 : i64, scratch_operands = 1 : i64, tpu.core_type = #tpu.core_type<tc>, window_params = [{transform_indices = @transform_0, window_bounds = array<i64: 2>}, {transform_indices = @transform_1, window_bounds = array<i64: 16, 16>}, {transform_indices = @transform_2, window_bounds = array<i64: 16, 16>}, {transform_indices = @transform_3, window_bounds = array<i64: 16, 8>}, {transform_indices = @transform_4, window_bounds = array<i64: 16, 1>}, {transform_indices = @transform_5, window_bounds = array<i64: 3>}]} {
    %c0_i32 = arith.constant 0 : i32
    %0 = arith.cmpi eq, %arg0, %c0_i32 : i32
    %1 = arith.extui %0 : i1 to i32
    %c0_i32_0 = arith.constant 0 : i32
    %2 = arith.cmpi ne, %1, %c0_i32_0 : i32
    scf.if %2 {
      %cst_24 = arith.constant 0.000000e+00 : f32
      %c0_25 = arith.constant 0 : index
      %68 = memref.load %arg7[%c0_25] : memref<2xf32, #tpu.memory_space<smem>>
      memref.store %cst_24, %arg7[%c0_25] : memref<2xf32, #tpu.memory_space<smem>>
      %cst_26 = arith.constant 0.000000e+00 : f32
      %c1_27 = arith.constant 1 : index
      %69 = memref.load %arg7[%c1_27] : memref<2xf32, #tpu.memory_space<smem>>
      memref.store %cst_26, %arg7[%c1_27] : memref<2xf32, #tpu.memory_space<smem>>
    } else {
    }
    %c16_i32 = arith.constant 16 : i32
    %3 = arith.muli %arg0, %c16_i32 : i32
    %4 = tpu.iota {dimensions = array<i32: 0>} : vector<16x1xi32>
    %5 = vector.broadcast %3 : i32 to vector<16x1xi32>
    %6 = arith.addi %5, %4 : vector<16x1xi32>
    %c10_i32 = arith.constant 10 : i32
    %7 = vector.broadcast %c10_i32 : i32 to vector<16x1xi32>
    %8 = arith.cmpi slt, %6, %7 : vector<16x1xi32>
    %9 = arith.extui %8 : vector<16x1xi1> to vector<16x1xi32>
    %10 = arith.sitofp %9 : vector<16x1xi32> to vector<16x1xf32>
    %c0 = arith.constant 0 : index
    %c0_1 = arith.constant 0 : index
    %11 = vector.load %arg2[%c0, %c0_1] : memref<16x16xf32, #tpu.memory_space<vmem>>, vector<16x16xf32>
    %c0_2 = arith.constant 0 : index
    %c0_3 = arith.constant 0 : index
    %12 = vector.load %arg3[%c0_2, %c0_3] : memref<16x16xf32, #tpu.memory_space<vmem>>, vector<16x16xf32>
    %13 = math.log %11 : vector<16x16xf32>
    %cst = arith.constant -1.000000e+02 : f32
    %14 = vector.broadcast %cst : f32 to vector<16x16xf32>
    %15 = arith.maximumf %13, %14 : vector<16x16xf32>
    %cst_4 = arith.constant 1.000000e+00 : f32
    %16 = vector.broadcast %cst_4 : f32 to vector<16x16xf32>
    %17 = arith.subf %16, %11 : vector<16x16xf32>
    %18 = math.log %17 : vector<16x16xf32>
    %cst_5 = arith.constant -1.000000e+02 : f32
    %19 = vector.broadcast %cst_5 : f32 to vector<16x16xf32>
    %20 = arith.maximumf %18, %19 : vector<16x16xf32>
    %21 = arith.mulf %12, %15 : vector<16x16xf32>
    %cst_6 = arith.constant 1.000000e+00 : f32
    %22 = vector.broadcast %cst_6 : f32 to vector<16x16xf32>
    %23 = arith.subf %22, %12 : vector<16x16xf32>
    %24 = arith.mulf %23, %20 : vector<16x16xf32>
    %25 = arith.addf %21, %24 : vector<16x16xf32>
    %cst_7 = arith.constant 0.000000e+00 : f32
    %26 = vector.broadcast %cst_7 : f32 to vector<16x16xf32>
    %27 = arith.subf %26, %25 : vector<16x16xf32>
    %cst_8 = arith.constant dense<0.000000e+00> : vector<16xf32>
    %28 = vector.multi_reduction <add>, %27, %cst_8 [1] : vector<16x16xf32> to vector<16xf32>
    %29 = vector.shape_cast %28 : vector<16xf32> to vector<16x1xf32>
    %c0_9 = arith.constant 0 : index
    %30 = memref.load %arg7[%c0_9] : memref<2xf32, #tpu.memory_space<smem>>
    %31 = arith.mulf %29, %10 : vector<16x1xf32>
    %32 = vector.shape_cast %31 : vector<16x1xf32> to vector<1x16x1xf32>
    %cst_10 = arith.constant dense<0.000000e+00> : vector<1xf32>
    %33 = vector.multi_reduction <add>, %32, %cst_10 [1, 2] : vector<1x16x1xf32> to vector<1xf32>
    %34 = vector.shape_cast %33 : vector<1xf32> to vector<1x1x1xf32>
    %35 = vector.extract %34[0, 0, 0] : f32 from vector<1x1x1xf32>
    %36 = arith.addf %30, %35 : f32
    %c0_11 = arith.constant 0 : index
    %37 = memref.load %arg7[%c0_11] : memref<2xf32, #tpu.memory_space<smem>>
    memref.store %36, %arg7[%c0_11] : memref<2xf32, #tpu.memory_space<smem>>
    %c0_12 = arith.constant 0 : index
    %c0_13 = arith.constant 0 : index
    %38 = vector.load %arg4[%c0_12, %c0_13] : memref<16x8xf32, #tpu.memory_space<vmem>>, vector<16x8xf32>
    %c0_14 = arith.constant 0 : index
    %c0_15 = arith.constant 0 : index
    %39 = vector.load %arg5[%c0_14, %c0_15] : memref<16x1xi32, #tpu.memory_space<vmem>>, vector<16x1xi32>
    %cst_16 = arith.constant dense<0xFF800000> : vector<16xf32>
    %40 = vector.multi_reduction <maximumf>, %38, %cst_16 [1] : vector<16x8xf32> to vector<16xf32>
    %41 = vector.shape_cast %40 : vector<16xf32> to vector<16x1xf32>
    %42 = vector.broadcast %41 : vector<16x1xf32> to vector<16x8xf32>
    %43 = arith.subf %38, %42 : vector<16x8xf32>
    %44 = math.exp %43 : vector<16x8xf32>
    %cst_17 = arith.constant dense<0.000000e+00> : vector<16xf32>
    %45 = vector.multi_reduction <add>, %44, %cst_17 [1] : vector<16x8xf32> to vector<16xf32>
    %46 = vector.shape_cast %45 : vector<16xf32> to vector<16x1xf32>
    %47 = math.log %46 : vector<16x1xf32>
    %48 = arith.addf %41, %47 : vector<16x1xf32>
    %49 = tpu.iota {dimensions = array<i32: 1>} : vector<16x8xi32>
    %50 = vector.broadcast %39 : vector<16x1xi32> to vector<16x8xi32>
    %51 = arith.cmpi eq, %49, %50 : vector<16x8xi32>
    %cst_18 = arith.constant 0.000000e+00 : f32
    %52 = vector.broadcast %cst_18 : f32 to vector<16x8xf32>
    %53 = arith.select %51, %38, %52 : vector<16x8xi1>, vector<16x8xf32>
    %cst_19 = arith.constant dense<0.000000e+00> : vector<16xf32>
    %54 = vector.multi_reduction <add>, %53, %cst_19 [1] : vector<16x8xf32> to vector<16xf32>
    %55 = vector.shape_cast %54 : vector<16xf32> to vector<16x1xf32>
    %c1 = arith.constant 1 : index
    %56 = memref.load %arg7[%c1] : memref<2xf32, #tpu.memory_space<smem>>
    %57 = arith.subf %48, %55 : vector<16x1xf32>
    %58 = arith.mulf %57, %10 : vector<16x1xf32>
    %59 = vector.shape_cast %58 : vector<16x1xf32> to vector<1x16x1xf32>
    %cst_20 = arith.constant dense<0.000000e+00> : vector<1xf32>
    %60 = vector.multi_reduction <add>, %59, %cst_20 [1, 2] : vector<1x16x1xf32> to vector<1xf32>
    %61 = vector.shape_cast %60 : vector<1xf32> to vector<1x1x1xf32>
    %62 = vector.extract %61[0, 0, 0] : f32 from vector<1x1x1xf32>
    %63 = arith.addf %56, %62 : f32
    %c1_21 = arith.constant 1 : index
    %64 = memref.load %arg7[%c1_21] : memref<2xf32, #tpu.memory_space<smem>>
    memref.store %63, %arg7[%c1_21] : memref<2xf32, #tpu.memory_space<smem>>
    %c0_i32_22 = arith.constant 0 : i32
    %65 = arith.cmpi eq, %arg0, %c0_i32_22 : i32
    %66 = arith.extui %65 : i1 to i32
    %c0_i32_23 = arith.constant 0 : i32
    %67 = arith.cmpi ne, %66, %c0_i32_23 : i32
    scf.if %67 {
      %c0_24 = arith.constant 0 : index
      %68 = memref.load %arg1[%c0_24] : memref<2xf32, #tpu.memory_space<smem>>
      %c0_25 = arith.constant 0 : index
      %69 = memref.load %arg7[%c0_25] : memref<2xf32, #tpu.memory_space<smem>>
      %70 = arith.mulf %68, %69 : f32
      %cst_26 = arith.constant 1.600000e+02 : f32
      %71 = arith.divf %70, %cst_26 : f32
      %c1_27 = arith.constant 1 : index
      %72 = memref.load %arg1[%c1_27] : memref<2xf32, #tpu.memory_space<smem>>
      %c1_28 = arith.constant 1 : index
      %73 = memref.load %arg7[%c1_28] : memref<2xf32, #tpu.memory_space<smem>>
      %74 = arith.mulf %72, %73 : f32
      %cst_29 = arith.constant 1.000000e+01 : f32
      %75 = arith.divf %74, %cst_29 : f32
      %c0_30 = arith.constant 0 : index
      %76 = memref.load %arg6[%c0_30] : memref<3xf32, #tpu.memory_space<smem>>
      memref.store %71, %arg6[%c0_30] : memref<3xf32, #tpu.memory_space<smem>>
      %c1_31 = arith.constant 1 : index
      %77 = memref.load %arg6[%c1_31] : memref<3xf32, #tpu.memory_space<smem>>
      memref.store %75, %arg6[%c1_31] : memref<3xf32, #tpu.memory_space<smem>>
      %78 = arith.addf %71, %75 : f32
      %c2 = arith.constant 2 : index
      %79 = memref.load %arg6[%c2] : memref<3xf32, #tpu.memory_space<smem>>
      memref.store %78, %arg6[%c2] : memref<3xf32, #tpu.memory_space<smem>>
    } else {
    }
    return
  }
  func.func @transform_0(%arg0: i32) -> i32 {
    %c0_i32 = arith.constant 0 : i32
    %c0_i32_0 = arith.constant 0 : i32
    return %c0_i32 : i32
  }
  func.func @transform_1(%arg0: i32) -> (i32, i32) {
    %c0_i32 = arith.constant 0 : i32
    %c0_i32_0 = arith.constant 0 : i32
    return %arg0, %c0_i32 : i32, i32
  }
  func.func @transform_2(%arg0: i32) -> (i32, i32) {
    %c0_i32 = arith.constant 0 : i32
    %c0_i32_0 = arith.constant 0 : i32
    return %arg0, %c0_i32 : i32, i32
  }
  func.func @transform_3(%arg0: i32) -> (i32, i32) {
    %c0_i32 = arith.constant 0 : i32
    %c0_i32_0 = arith.constant 0 : i32
    return %arg0, %c0_i32 : i32, i32
  }
  func.func @transform_4(%arg0: i32) -> (i32, i32) {
    %c0_i32 = arith.constant 0 : i32
    %c0_i32_0 = arith.constant 0 : i32
    return %arg0, %c0_i32 : i32, i32
  }
  func.func @transform_5(%arg0: i32) -> i32 {
    %c0_i32 = arith.constant 0 : i32
    %c0_i32_0 = arith.constant 0 : i32
    return %c0_i32 : i32
  }
}

</mosaic_0001>

<llo_original>
// kernel: tpu_custom_call.1
$region0: #{tpu_custom_call.1}
  #allocation0 [shape = 'u32[]', space=smem, size = 0x4, offset = 0x4, fixed_abs, tag = 'smem constant byte address 0x4 - core index']
  #allocation1 [shape = 'u32[72,128]{1,0:T(1,128)}', space=vmem, size = 0x9000, scoped, tag = 'internal scratch']
  #allocation2 [shape = 'f32[2]{0:T(128)}', space=smem, size = 0x200, scoped, tag = 'scratch operand']
  %s0 = inlined_call_operand.vmem [shape: f32[2], index: 0, kind: input, shape index: {}]
  %s1 = inlined_call_operand.vmem [shape: f32[16,16], index: 1, kind: input, shape index: {}]
  %s2 = inlined_call_operand.vmem [shape: f32[16,16], index: 2, kind: input, shape index: {}]
  %s3 = inlined_call_operand.vmem [shape: f32[16,8], index: 3, kind: input, shape index: {}]
  %s4 = inlined_call_operand.vmem [shape: s32[16,1], index: 4, kind: input, shape index: {}]
  %s5 = inlined_call_operand.hbm [shape: f32[3], index: 5, kind: output, shape index: {}]
  %s6 = sld [smem:[#allocation0]]
  $region42: #{tpu_custom_call.1} parent=0
    _
  %s8 = ssub.s32 1, %s6
  %s9 = scalar_select 0, %s8, %s6
  $region1: #{tpu_custom_call.1} parent=0
    #allocation3 [shape = 'u8[512]{0}', space=smem, size = 0x200, scoped, tag = 'input window, operand 0, single buffered']
    #allocation4 [shape = 's32[1]{0}', space=sflag, size = 0x4, scoped, tag = 'scoped memory for tpu_custom_call.1']
    #allocation5 [shape = 's32[1]{0}', space=sflag, size = 0x4, scoped, tag = 'scoped memory for tpu_custom_call.1']
    #allocation6 [shape = 'u8[512]{0}', space=smem, size = 0x200, scoped, tag = 'output window, operand 0, single buffered']
    %10 = vsyncpa [#allocation5], 0
    %11 = vsyncpa [#allocation4], 0
    // Predicated region
    $region2: #{tpu_custom_call.1} parent=1 // pred_check
      _
    $region3: #{tpu_custom_call.1} parent=1 // pred_check_branch
      %13 = sbr.rel (0) target = $region5
    $region4: #{tpu_custom_call.1} parent=1 // pred_region
      %15 = vsyncadd [#allocation5], 0
      %s17 = sshll.u32 %s0, 4
      %s18 = int_to_ptr.vmem [resolvable:$true] %s17
      %20 = dma.vmem_to_smem %s18, 16, [#allocation3], [#allocation5]
    $region5: #{tpu_custom_call.1} parent=1 // pred_fallthru
      _
    // Predicated region
    $region6: #{tpu_custom_call.1} parent=1 // pred_check
      _
    $region7: #{tpu_custom_call.1} parent=1 // pred_check_branch
      %22 = sbr.rel (0) target = $region9
    $region8: #{tpu_custom_call.1} parent=1 // pred_region
      _
    $region9: #{tpu_custom_call.1} parent=1 // pred_fallthru
      _
    // Predicated region
    $region10: #{tpu_custom_call.1} parent=1 // pred_check
      _
    $region11: #{tpu_custom_call.1} parent=1 // pred_check_branch
      %24 = sbr.rel (0) target = $region13
    $region12: #{tpu_custom_call.1} parent=1 // pred_region
      _
    $region13: #{tpu_custom_call.1} parent=1 // pred_fallthru
      _
    // Predicated region
    $region14: #{tpu_custom_call.1} parent=1 // pred_check
      _
    $region15: #{tpu_custom_call.1} parent=1 // pred_check_branch
      %26 = sbr.rel (0) target = $region17
    $region16: #{tpu_custom_call.1} parent=1 // pred_region
      _
    $region17: #{tpu_custom_call.1} parent=1 // pred_fallthru
      _
    // Predicated region
    $region18: #{tpu_custom_call.1} parent=1 // pred_check
      _
    $region19: #{tpu_custom_call.1} parent=1 // pred_check_branch
      %28 = sbr.rel (0) target = $region21
    $region20: #{tpu_custom_call.1} parent=1 // pred_region
      _
    $region21: #{tpu_custom_call.1} parent=1 // pred_fallthru
      _
    // Predicated region
    $region22: #{tpu_custom_call.1} parent=1 // pred_check
      _
    $region23: #{tpu_custom_call.1} parent=1 // pred_check_branch
      %30 = sbr.rel (0) target = $region25
    $region24: #{tpu_custom_call.1} parent=1 // pred_region
      %32 = dma.done [#allocation5], 16
    $region25: #{tpu_custom_call.1} parent=1 // pred_fallthru
      _
    %33 = sfence
    %p34 = scmp.eq.s32.totalorder 0, 0
    // Predicated region
    $region26: #{tpu_custom_call.1} parent=1 // pred_check
      %p35 = pneg %p34
    $region27: #{tpu_custom_call.1} parent=1 // pred_check_branch
      %37 = sbr.rel (%p35) target = $region29
    $region28: #{tpu_custom_call.1} parent=1 // pred_region
      %s38 = scalar_lea.smem [#allocation2], 0
      %39 = sst [smem:[%s38]] 0.0
      %s40 = scalar_lea.smem [#allocation2], 1
      %41 = sst [smem:[%s40]] 0.0
    $region29: #{tpu_custom_call.1} parent=1 // pred_fallthru
      _
    %s42 = smul.u32 0, 16
    %v43 = vlaneseq
    %v44 = vshrl.u32 %v43, 7
    %v45 = vadd.s32 %v44, 8
    %v46 = vstv %s42
    %v47 = vadd.s32 %v46, %v44
    %v48 = vadd.s32 %v46, %v45
    %vm49 = vcmp.lt.s32.totalorder %v47, 10
    %vm50 = vcmp.lt.s32.totalorder %v48, 10
    %v51 = vsel %vm49, 1, 0
    %v52 = vsel %vm50, 1, 0
    %v53 = vcvt.s32.f32 %v51
    %v54 = vcvt.s32.f32 %v52
    %v55 = vld [vmem:[%s1] sm:$0xff]
    %v56 = vld [vmem:[%s1 + $0x8] sm:$0xff]
    %v57 = vld [vmem:[%s2] sm:$0xff]
    %v58 = vld [vmem:[%s2 + $0x8] sm:$0xff]
    %v59 = vlog2.pop %v55
    %v60 = vmul.f32 %v59, 0.6931472
    %v61 = vlog2.pop %v56
    %v62 = vmul.f32 %v61, 0.6931472
    %v63 = vmax.f32 %v60, -100.0
    %v64 = vmax.f32 %v62, -100.0
    %v65 = vsub.f32 1.0, %v55
    %v66 = vsub.f32 1.0, %v56
    %v67 = vlog2.pop %v65
    %v68 = vmul.f32 %v67, 0.6931472
    %v69 = vlog2.pop %v66
    %v70 = vmul.f32 %v69, 0.6931472
    %v71 = vmax.f32 %v68, -100.0
    %v72 = vmax.f32 %v70, -100.0
    %v73 = vmul.f32 %v57, %v63
    %v74 = vmul.f32 %v58, %v64
    %v75 = vsub.f32 1.0, %v57
    %v76 = vsub.f32 1.0, %v58
    %v77 = vmul.f32 %v75, %v71
    %v78 = vmul.f32 %v76, %v72
    %v79 = vadd.f32 %v73, %v77
    %v80 = vadd.f32 %v74, %v78
    %v81 = vsub.f32 0.0, %v79
    %v82 = vsub.f32 0.0, %v80
    %vm83 = vcmask 130048
    %v84 = vsel %vm83, %v81, 0.0
    %85 = vadd.xlane.f32.xlu0 %v84
    %v86 = vpop.xlane.xlu0 %85
    %v87 = vsel %vm83, %v82, 0.0
    %88 = vadd.xlane.f32.xlu0 %v87
    %v89 = vpop.xlane.xlu0 %88
    %s90 = sld [smem:[#allocation2]]
    %v91 = vmul.f32 %v86, %v53
    %v92 = vmul.f32 %v89, %v54
    %vm93 = vcmask 7168
    %v94 = vsel %vm93, %v91, 0.0
    %v95 = vsel %vm93, %v92, 0.0
    %v96 = vadd.f32 %v94, %v95
    %97 = vadd.xlane.f32.xlu0 %v96
    %v98 = vpop.xlane.xlu0 %97
    %v99 = vrot.slane %v98, 4
    %v100 = vadd.f32 %v98, %v99
    %v101 = vrot.slane %v100, 2
    %v102 = vadd.f32 %v100, %v101
    %v103 = vrot.slane %v102, 1
    %v104 = vadd.f32 %v102, %v103
    %s105 = vtos %v104
    %s106 = sadd.f32 %s90, %s105
    %s107 = scalar_lea.smem [#allocation2], 0
    %108 = sst [smem:[%s107]] %s106
    %v109 = vld [vmem:[%s3] sm:$0xff]
    %v110 = vld [vmem:[%s3 + $0x8] sm:$0xff]
    %v111 = vld [vmem:[%s4] sm:$0xff]
    %v112 = vld [vmem:[%s4 + $0x8] sm:$0xff]
    %vm113 = vcmask 64512
    %v114 = vsel %vm113, %v109, -inf
    %115 = vmax.xlane.f32.xlu0 %v114
    %v116 = vpop.xlane.xlu0 %115
    %v117 = vsel %vm113, %v110, -inf
    %118 = vmax.xlane.f32.xlu0 %v117
    %v119 = vpop.xlane.xlu0 %118
    %v120 = vsub.f32 %v109, %v116
    %v121 = vsub.f32 %v110, %v119
    %v122 = vmul.f32 %v120, 1.442695
    %v123 = vpow.pop %v122
    %v124 = vmul.f32 %v121, 1.442695
    %v125 = vpow.pop %v124
    %v126 = vsel %vm113, %v123, 0.0
    %127 = vadd.xlane.f32.xlu0 %v126
    %v128 = vpop.xlane.xlu0 %127
    %v129 = vsel %vm113, %v125, 0.0
    %130 = vadd.xlane.f32.xlu0 %v129
    %v131 = vpop.xlane.xlu0 %130
    %v132 = vlog2.pop %v128
    %v133 = vmul.f32 %v132, 0.6931472
    %v134 = vlog2.pop %v131
    %v135 = vmul.f32 %v134, 0.6931472
    %v136 = vadd.f32 %v116, %v133
    %v137 = vadd.f32 %v119, %v135
    %v138 = vlaneseq
    %v139 = vand.u32 %v138, 127
    %140 = vset.pattern.permute.xlu0 0
    %141 = vperm.xlu0 %140, %v111
    %v142 = vpop.permute.xlu0 %141
    %143 = vset.pattern.permute.xlu0 0
    %144 = vperm.xlu0 %143, %v112
    %v145 = vpop.permute.xlu0 %144
    %vm146 = vcmp.eq.s32.totalorder %v139, %v142
    %vm147 = vcmp.eq.s32.totalorder %v139, %v145
    %v148 = vsel %vm146, %v109, 0.0
    %v149 = vsel %vm147, %v110, 0.0
    %v150 = vsel %vm113, %v148, 0.0
    %151 = vadd.xlane.f32.xlu0 %v150
    %v152 = vpop.xlane.xlu0 %151
    %v153 = vsel %vm113, %v149, 0.0
    %154 = vadd.xlane.f32.xlu0 %v153
    %v155 = vpop.xlane.xlu0 %154
    %s156 = sld [smem:[#allocation2 + $0x1]]
    %v157 = vsub.f32 %v136, %v152
    %v158 = vsub.f32 %v137, %v155
    %v159 = vmul.f32 %v157, %v53
    %v160 = vmul.f32 %v158, %v54
    %v161 = vsel %vm93, %v159, 0.0
    %v162 = vsel %vm93, %v160, 0.0
    %v163 = vadd.f32 %v161, %v162
    %164 = vadd.xlane.f32.xlu0 %v163
    %v165 = vpop.xlane.xlu0 %164
    %v166 = vrot.slane %v165, 4
    %v167 = vadd.f32 %v165, %v166
    %v168 = vrot.slane %v167, 2
    %v169 = vadd.f32 %v167, %v168
    %v170 = vrot.slane %v169, 1
    %v171 = vadd.f32 %v169, %v170
    %s172 = vtos %v171
    %s173 = sadd.f32 %s156, %s172
    %s174 = scalar_lea.smem [#allocation2], 1
    %175 = sst [smem:[%s174]] %s173
    // Predicated region
    $region30: #{tpu_custom_call.1} parent=1 // pred_check
      %p176 = pneg %p34
    $region31: #{tpu_custom_call.1} parent=1 // pred_check_branch
      %178 = sbr.rel (%p176) target = $region33
    $region32: #{tpu_custom_call.1} parent=1 // pred_region
      %s179 = sld [smem:[#allocation3]]
      %s180 = sld [smem:[#allocation2]]
      %s181 = smul.f32 %s179, %s180
      %v182 = vrcp.pop 160.0
      %v183 = vmul.f32 160.0, %v182
      %v184 = vsub.f32 1.0, %v183
      %v185 = vmul.f32 %v182, %v184
      %v186 = vadd.f32 %v182, %v185
      %vm187 = vweird.f32 %v182
      %v188 = vsel %vm187, %v182, %v186
      %s189 = vtos %v188
      %s190 = smul.f32 %s181, %s189
      %s191 = sld [smem:[#allocation3 + $0x1]]
      %s192 = sld [smem:[#allocation2 + $0x1]]
      %s193 = smul.f32 %s191, %s192
      %v194 = vrcp.pop 10.0
      %v195 = vmul.f32 10.0, %v194
      %v196 = vsub.f32 1.0, %v195
      %v197 = vmul.f32 %v194, %v196
      %v198 = vadd.f32 %v194, %v197
      %vm199 = vweird.f32 %v194
      %v200 = vsel %vm199, %v194, %v198
      %s201 = vtos %v200
      %s202 = smul.f32 %s193, %s201
      %s203 = scalar_lea.smem [#allocation6], 0
      %204 = sst [smem:[%s203]] %s190
      %s205 = scalar_lea.smem [#allocation6], 1
      %206 = sst [smem:[%s205]] %s202
      %s207 = sadd.f32 %s190, %s202
      %s208 = scalar_lea.smem [#allocation6], 2
      %209 = sst [smem:[%s208]] %s207
    $region33: #{tpu_custom_call.1} parent=1 // pred_fallthru
      _
    // Predicated region
    $region34: #{tpu_custom_call.1} parent=1 // pred_check
      _
    $region35: #{tpu_custom_call.1} parent=1 // pred_check_branch
      %211 = sbr.rel (0) target = $region37
    $region36: #{tpu_custom_call.1} parent=1 // pred_region
      %213 = vsyncadd [#allocation4], 0
      %s215 = sshll.u32 %s5, 4
      %s216 = int_to_ptr.hbm [resolvable:$true] %s215
      %218 = dma.smem_to_hbm [#allocation6], 16, %s216, [#allocation4]
    $region37: #{tpu_custom_call.1} parent=1 // pred_fallthru
      _
    // Predicated region
    $region38: #{tpu_custom_call.1} parent=1 // pred_check
      _
    $region39: #{tpu_custom_call.1} parent=1 // pred_check_branch
      %220 = sbr.rel (0) target = $region41
    $region40: #{tpu_custom_call.1} parent=1 // pred_region
      %222 = dma.done [#allocation4], 16
    $region41: #{tpu_custom_call.1} parent=1 // pred_fallthru
      _
    %223 = sfence
    %224 = vsyncpa [#allocation4], 1
    %225 = vsyncpa [#allocation5], 1

</llo_original>
